<compile_context>
chip_gen: v7x
topology: tpu7x:2x2x1
jax: 0.10.0
libtpu: 0.0.40
codegen_flags: <defaults>
</compile_context>

<pallas_src>
import functools

import numpy as np

import jax
import jax.numpy as jnp
from jax import lax
from jax.experimental import pallas as pl
from jax.experimental.pallas import tpu as pltpu


# ----------------------------------------------------------------------------- #
# Kernels
# ----------------------------------------------------------------------------- #
def _conv1_stats_kernel(x_ref, w_ref, sum_ref, sq_ref):
    # Per-channel sum / sum-of-squares of the pre-bias conv1 activation,
    # accumulated across the inner ("arbitrary") grid axis; one accumulator
    # block per outer ("parallel") grid index (per TensorCore on v7x).
    @pl.when(pl.program_id(1) == 0)
    def _():
        sum_ref[...] = jnp.zeros_like(sum_ref)
        sq_ref[...] = jnp.zeros_like(sq_ref)

    acc = jnp.dot(x_ref[...], w_ref[...], preferred_element_type=jnp.float32)
    # Zero-padded tail rows give acc == 0 -> contribute exactly 0 (no mask needed;
    # we divide by the true row count outside).  The (1,c) tile sums broadcast over
    # the 8 accumulator rows (all rows hold the same totals).
    sum_ref[...] += jnp.sum(acc, axis=0, keepdims=True)
    sq_ref[...] += jnp.sum(acc * acc, axis=0, keepdims=True)


def _matmul_bias_kernel(x_ref, w_ref, b_ref, o_ref):
    # o = x @ w + b  (conv1, BN and conv2 already folded into w/b by the wrapper)
    acc = jnp.dot(x_ref[...], w_ref[...], preferred_element_type=jnp.float32)
    o_ref[...] = (acc + b_ref[...]).astype(o_ref.dtype)


# ----------------------------------------------------------------------------- #
# Tiling / feature helpers
# ----------------------------------------------------------------------------- #
def _round_up(x, m):
    return ((x + m - 1) // m) * m


def _sublane_mult(itemsize):
    # Native sublane tiling: 8 for f32, 16 for bf16, 32 for int8.
    return max(8, 32 // int(itemsize))


def _padded_tile_bytes(rows, cols, itemsize):
    # VMEM footprint of a tile after (sublane, 128-lane) layout padding.
    itemsize = int(itemsize)
    return (_round_up(max(rows, 1), _sublane_mult(itemsize))
            * _round_up(max(cols, 1), 128) * itemsize)


def _vmem_budget():
    # Generation-aware scoped-VMEM budget (v7x: 64 MiB physical per TC; v5e/v6e: 128 MiB).
    phys = None
    try:
        info = pltpu.get_tpu_info()
        phys = getattr(info, "vmem_capacity_bytes", None)
    except Exception:
        phys = None
    if not phys or phys <= 0:
        phys = 64 * 1024 * 1024            # conservative default (v7x per-core)
    limit = max(min(phys // 2, 64 * 1024 * 1024), 16 * 1024 * 1024)
    budget = (limit * 3) // 4              # leave headroom for compiler scratch
    return budget, limit


@functools.lru_cache(maxsize=None)
def _buffered_supported():
    # Feature-probe pl.Buffered(1) (single-buffered grid-invariant operands) with a
    # tiny compile so we never crash the real kernel on an older Pallas.
    if not hasattr(pl, "Buffered"):
        return False
    try:
        def _k(x_ref, o_ref):
            o_ref[...] = x_ref[...] * 2.0

        fn = pl.pallas_call(
            _k,
            out_shape=jax.ShapeDtypeStruct((8, 128), jnp.float32),
            grid=(2,),
            in_specs=[pl.BlockSpec((8, 128), lambda i: (0, 0),
                                   pipeline_mode=pl.Buffered(1))],
            out_specs=pl.BlockSpec((8, 128), lambda i: (0, 0)),
        )
        jax.jit(fn).lower(np.zeros((8, 128), np.float32)).compile()
        return True
    except Exception:
        return False


def _const_spec(shape, index_map):
    # BlockSpec for a grid-invariant operand: single-buffered when supported.
    if _buffered_supported():
        return pl.BlockSpec(shape, index_map, pipeline_mode=pl.Buffered(1))
    return pl.BlockSpec(shape, index_map)


def _pick_tm(m, budget_rows, cap, mult):
    """Largest row tile <= cap/budget that (preferably) divides the aligned row count,
    so no padded copy of the big operand is needed (perf feedback)."""
    m_al = _round_up(m, mult)
    tm_max = max(mult, min(cap, int(budget_rows), m_al))
    tm_max = (tm_max // mult) * mult
    floor = max(mult, (tm_max // 2 // mult) * mult)
    t = tm_max
    while t >= floor:
        if m_al % t == 0:
            return t, m_al                 # no padding beyond the sublane round-up
        t -= mult
    return tm_max, _round_up(m_al, tm_max)  # ragged: accept a (rare) zero-row pad


# ----------------------------------------------------------------------------- #
# Pallas wrappers
# ----------------------------------------------------------------------------- #
def conv1_batch_stats(p1, w1_mat, *, budget, limit):
    """Per-channel (sum, sum_of_squares) of the pre-bias conv1 activation p1 @ w1_mat.
    y1 is never materialized.  Leading size-2 'parallel' grid axis uses both v7x cores."""
    m, k = p1.shape
    _, c = w1_mat.shape
    in_isz = p1.dtype.itemsize
    mult = _sublane_mult(in_isz)
    wfac = 1 if _buffered_supported() else 2

    fixed = (wfac * _padded_tile_bytes(k, c, w1_mat.dtype.itemsize)
             + 4 * _padded_tile_bytes(8, c, 4))
    per_row = 2 * _round_up(k, 128) * in_isz          # double-buffered input rows
    budget_rows = max(mult, (budget - fixed) // per_row)
    tm, m_pad = _pick_tm(m, budget_rows, cap=4096, mult=mult)
    if m_pad != m:
        p1 = jnp.pad(p1, ((0, m_pad - m), (0, 0)))

    m_tiles = m_pad // tm
    g = 2 if (m_tiles >= 2 and m_tiles % 2 == 0) else 1   # v7x: one accumulator per core
    steps = m_tiles // g

    sums, sqs = pl.pallas_call(
        _conv1_stats_kernel,
        out_shape=(jax.ShapeDtypeStruct((g * 8, c), jnp.float32),
                   jax.ShapeDtypeStruct((g * 8, c), jnp.float32)),
        grid=(g, steps),
        in_specs=[
            pl.BlockSpec((tm, k), lambda gi, i: (gi * steps + i, 0)),
            _const_spec((k, c), lambda gi, i: (0, 0)),
        ],
        out_specs=(
            pl.BlockSpec((8, c), lambda gi, i: (gi, 0)),
            pl.BlockSpec((8, c), lambda gi, i: (gi, 0)),
        ),
        compiler_params=pltpu.CompilerParams(
            dimension_semantics=("parallel", "arbitrary"),
            vmem_limit_bytes=limit,
        ),
    )(p1, w1_mat)

    s = jnp.sum(sums.reshape(g, 8, c)[:, 0, :], axis=0)
    sq = jnp.sum(sqs.reshape(g, 8, c)[:, 0, :], axis=0)
    return s, sq


def matmul_bias(x2d, w, b, *, out_dtype, budget, limit):
    """out = x2d @ w + b with a (M, N) 'parallel' grid.  Weight stays fully N-resident
    (single-buffered) whenever its padded footprint fits half the VMEM budget."""
    m, k = x2d.shape
    _, n = w.shape
    in_isz = x2d.dtype.itemsize
    w_isz = w.dtype.itemsize
    out_isz = jnp.dtype(out_dtype).itemsize
    mult = _sublane_mult(in_isz)
    wfac = 1 if _buffered_supported() else 2

    if wfac * _padded_tile_bytes(k, n, w_isz) <= budget // 2:
        tn = n                                             # full-N resident weight
    else:
        tn = next((c for c in (512, 256, 128) if n % c == 0), n)

    fixed = (wfac * _padded_tile_bytes(k, tn, w_isz)
             + wfac * _padded_tile_bytes(1, tn, 4))
    per_row = 2 * _round_up(k, 128) * in_isz + 2 * _round_up(tn, 128) * out_isz
    budget_rows = max(mult, (budget - fixed) // per_row)
    tm, m_pad = _pick_tm(m, budget_rows, cap=2048, mult=mult)
    if m_pad != m:
        x2d = jnp.pad(x2d, ((0, m_pad - m), (0, 0)))

    spec = _const_spec if tn == n else pl.BlockSpec        # Buffered(1) only if invariant
    out = pl.pallas_call(
        _matmul_bias_kernel,
        out_shape=jax.ShapeDtypeStruct((m_pad, n), out_dtype),
        grid=(m_pad // tm, n // tn),
        in_specs=[
            pl.BlockSpec((tm, k), lambda i, j: (i, 0)),
            spec((k, tn), lambda i, j: (0, j)),
            spec((1, tn), lambda i, j: (0, j)),
        ],
        out_specs=pl.BlockSpec((tm, tn), lambda i, j: (i, j)),
        compiler_params=pltpu.CompilerParams(
            dimension_semantics=("parallel", "parallel"),
            vmem_limit_bytes=limit,
        ),
    )(x2d, w, b.reshape(1, n).astype(jnp.float32))
    return out[:m] if m_pad != m else out


# ----------------------------------------------------------------------------- #
# PatchEmb forward
# ----------------------------------------------------------------------------- #
def patch_emb_forward(x, params, *, dim, patch_size, eps=1e-5,
                      operand_dtype=jnp.bfloat16):
    """x: (N, 3, H, W) float32 NCHW.  Returns (N, dim, H/patch_size, W/patch_size)."""
    w1, b1 = params["w1"], params["b1"]
    gamma, beta = params["gamma"], params["beta"]
    w2, b2 = params["w2"], params["b2"]

    n, cin, h, w = x.shape
    c1 = dim // 4
    p2 = patch_size // 4
    pp = p2 * p2
    assert h % patch_size == 0 and w % patch_size == 0, "spatial dims must divide patch_size"
    h2, w2s = h // patch_size, w // patch_size
    m2 = n * h2 * w2s                       # conv2 patch count
    m1 = m2 * pp                            # conv1 patch count
    k1 = cin * 16
    kc = pp * k1                            # folded reduction length

    budget, limit = _vmem_budget()

    # Single materialized im2col (in operand_dtype): rows = conv2 patches (n,u,v),
    # cols ordered (kh, kw, cin, a, b).  The conv1 im2col view is a free reshape.
    xo = x.astype(operand_dtype)
    pt = xo.reshape(n, cin, h2, p2, 4, w2s, p2, 4)
    pt = jnp.transpose(pt, (0, 2, 5, 3, 6, 1, 4, 7))   # (n, u, v, kh, kw, cin, a, b)
    p2d = pt.reshape(m2, kc)
    p1 = pt.reshape(m1, k1)
    # TODO(synk): avoid materializing `pt` in HBM (one extra read+write of x) via
    # CompilerParams(allow_input_fusion=...) or an in-kernel patch gather.

    # ---- pass 1: BN batch statistics from the pre-bias conv1 activation -------------
    w1_mat = w1.reshape(c1, k1).T                       # (k1, c1), rows (cin, a, b)
    s, sq = conv1_batch_stats(p1, w1_mat.astype(operand_dtype),
                              budget=budget, limit=limit)
    inv_m = 1.0 / float(m1)
    mean_acc = s * inv_m
    var = jnp.maximum(sq * inv_m - mean_acc * mean_acc, 0.0)   # pre-bias centring + clamp
    mean = mean_acc + b1
    scale = gamma * lax.rsqrt(var + eps)
    shift = beta - mean * scale
    # TODO(synk): running_mean / running_var buffer updates (training-only state) are
    # not materialized here.

    # ---- pass 2: conv1 + BN + conv2 folded into one affine map per conv2 patch ------
    #   out = p2d @ W_comb + B,  W_comb[(kh,kw,cin,a,b), d] = sum_c w1[c,cin,a,b]*scale_c*w2[d,c,kh,kw]
    w2_r = jnp.transpose(w2, (2, 3, 1, 0))              # (kh, kw, c1, dim)
    w_comb = jnp.einsum("kc,hwcd->hwkd", w1_mat * scale[None, :], w2_r).reshape(kc, dim)
    bias = b2 + (b1 * scale + shift) @ jnp.sum(w2_r, axis=(0, 1))

    y = matmul_bias(p2d, w_comb.astype(operand_dtype), bias,
                    out_dtype=jnp.float32, budget=budget, limit=limit)

    out = y.reshape(n, h2, w2s, dim)
    return jnp.transpose(out, (0, 3, 1, 2))


# ----------------------------------------------------------------------------- #
# Pure-JAX reference (lax.conv) for verification
# ----------------------------------------------------------------------------- #
def patch_emb_reference(x, params, *, dim, patch_size, eps=1e-5):
    def conv(x, w, b, stride):
        y = lax.conv_general_dilated(
            x, w, (stride, stride), "VALID",
            dimension_numbers=("NCHW", "OIHW", "NCHW"))
        return y + b[None, :, None, None]

    y1 = conv(x, params["w1"], params["b1"], 4)
    mean = jnp.mean(y1, axis=(0, 2, 3), keepdims=True)
    var = jnp.mean((y1 - mean) ** 2, axis=(0, 2, 3), keepdims=True)
    y1n = (y1 - mean) * lax.rsqrt(var + eps)
    y1n = y1n * params["gamma"][None, :, None, None] + params["beta"][None, :, None, None]
    p2 = patch_size // 4
    return conv(y1n, params["w2"], params["b2"], p2)


# ----------------------------------------------------------------------------- #
# Main
# ----------------------------------------------------------------------------- #
if __name__ == "__main__":
    dim = 32
    patch_size = 8
    N, H, W = 2, 16, 16
    c1 = dim // 4
    p2 = patch_size // 4

    key = jax.random.PRNGKey(0)
    k_x, k_w1, k_b1, k_g, k_be, k_w2, k_b2 = jax.random.split(key, 7)

    x = jax.random.normal(k_x, (N, 3, H, W), dtype=jnp.float32)
    params = {
        "w1": 0.1 * jax.random.normal(k_w1, (c1, 3, 4, 4), dtype=jnp.float32),
        "b1": 0.1 * jax.random.normal(k_b1, (c1,), dtype=jnp.float32),
        "gamma": 1.0 + 0.1 * jax.random.normal(k_g, (c1,), dtype=jnp.float32),
        "beta": 0.1 * jax.random.normal(k_be, (c1,), dtype=jnp.float32),
        "w2": 0.1 * jax.random.normal(k_w2, (dim, c1, p2, p2), dtype=jnp.float32),
        "b2": 0.1 * jax.random.normal(k_b2, (dim,), dtype=jnp.float32),
    }

    _ = _buffered_supported()   # run the feature probe once, outside jit tracing

    ref = patch_emb_reference(x, params, dim=dim, patch_size=patch_size)

    # Default path: bf16 operands, f32 MXU accumulation and f32 stats/BN/fold math.
    fwd = jax.jit(functools.partial(patch_emb_forward, dim=dim, patch_size=patch_size))
    out = fwd(x, params)
    jax.block_until_ready(out)
    assert out.shape == (N, dim, H // patch_size, W // patch_size), out.shape
    err_bf16 = float(jnp.max(jnp.abs(out - ref)))
    assert jnp.allclose(out, ref, atol=5e-2, rtol=5e-2), f"bf16 path err={err_bf16}"

    # f32-operand path for a tight check against the lax.conv reference.
    fwd32 = jax.jit(functools.partial(patch_emb_forward, dim=dim, patch_size=patch_size,
                                      operand_dtype=jnp.float32))
    out32 = fwd32(x, params)
    jax.block_until_ready(out32)
    err_f32 = float(jnp.max(jnp.abs(out32 - ref)))
    assert jnp.allclose(out32, ref, atol=2e-3, rtol=2e-3), f"f32 path err={err_f32}"

    print("KERNEL_OK")
</pallas_src>

<mosaic_0001>
module attributes {stable_mosaic.version = 11 : i64} {
  func.func @_conv1_stats_kernel(%arg0: i32, %arg1: i32, %arg2: memref<32x48xbf16, #tpu.memory_space<vmem>>, %arg3: memref<48x8xbf16, #tpu.memory_space<vmem>>, %arg4: memref<8x8xf32, #tpu.memory_space<vmem>>, %arg5: memref<8x8xf32, #tpu.memory_space<vmem>>) attributes {dimension_semantics = [#tpu.dimension_semantics<parallel>, #tpu.dimension_semantics<arbitrary>], iteration_bounds = array<i64: 1, 1>, scalar_prefetch = 0 : i64, scratch_operands = 0 : i64, tpu.core_type = #tpu.core_type<tc>, window_params = [{transform_indices = @transform_0, window_bounds = array<i64: 32, 48>}, {pipeline_mode = #tpu.pipeline_mode<synchronous>, transform_indices = @transform_1, window_bounds = array<i64: 48, 8>}, {transform_indices = @transform_2, window_bounds = array<i64: 8, 8>}, {transform_indices = @transform_3, window_bounds = array<i64: 8, 8>}]} {
    %c0_i32 = arith.constant 0 : i32
    %0 = arith.cmpi eq, %arg1, %c0_i32 : i32
    %1 = arith.extui %0 : i1 to i32
    %c0_i32_0 = arith.constant 0 : i32
    %2 = arith.cmpi ne, %1, %c0_i32_0 : i32
    scf.if %2 {
      %cst_14 = arith.constant 0.000000e+00 : f32
      %19 = vector.broadcast %cst_14 : f32 to vector<8x8xf32>
      %c0_15 = arith.constant 0 : index
      %c0_16 = arith.constant 0 : index
      %20 = vector.load %arg4[%c0_15, %c0_16] : memref<8x8xf32, #tpu.memory_space<vmem>>, vector<8x8xf32>
      tpu.vector_store %arg4[%c0_15, %c0_16], %19 {strides = array<i32>} : memref<8x8xf32, #tpu.memory_space<vmem>>, vector<8x8xf32>,
      %cst_17 = arith.constant 0.000000e+00 : f32
      %21 = vector.broadcast %cst_17 : f32 to vector<8x8xf32>
      %c0_18 = arith.constant 0 : index
      %c0_19 = arith.constant 0 : index
      %22 = vector.load %arg5[%c0_18, %c0_19] : memref<8x8xf32, #tpu.memory_space<vmem>>, vector<8x8xf32>
      tpu.vector_store %arg5[%c0_18, %c0_19], %21 {strides = array<i32>} : memref<8x8xf32, #tpu.memory_space<vmem>>, vector<8x8xf32>,
    } else {
    }
    %c0 = arith.constant 0 : index
    %c0_1 = arith.constant 0 : index
    %3 = vector.load %arg2[%c0, %c0_1] : memref<32x48xbf16, #tpu.memory_space<vmem>>, vector<32x48xbf16>
    %c0_2 = arith.constant 0 : index
    %c0_3 = arith.constant 0 : index
    %4 = vector.load %arg3[%c0_2, %c0_3] : memref<48x8xbf16, #tpu.memory_space<vmem>>, vector<48x8xbf16>
    %cst = arith.constant dense<0.000000e+00> : vector<32x8xf32>
    %5 = tpu.matmul %3, %4, %cst {dimension_numbers = #tpu.dot_dimension_numbers<[1], [0], [0], [1], [0, 0, 1, 1], [], []>} : vector<32x48xbf16>, vector<48x8xbf16>, vector<32x8xf32> -> vector<32x8xf32>
    %c0_4 = arith.constant 0 : index
    %c0_5 = arith.constant 0 : index
    %6 = vector.load %arg4[%c0_4, %c0_5] : memref<8x8xf32, #tpu.memory_space<vmem>>, vector<8x8xf32>
    %cst_6 = arith.constant dense<0.000000e+00> : vector<8xf32>
    %7 = vector.multi_reduction <add>, %5, %cst_6 [0] : vector<32x8xf32> to vector<8xf32>
    %8 = vector.shape_cast %7 : vector<8xf32> to vector<1x8xf32>
    %9 = vector.broadcast %8 : vector<1x8xf32> to vector<8x8xf32>
    %10 = arith.addf %6, %9 : vector<8x8xf32>
    %c0_7 = arith.constant 0 : index
    %c0_8 = arith.constant 0 : index
    %11 = vector.load %arg4[%c0_7, %c0_8] : memref<8x8xf32, #tpu.memory_space<vmem>>, vector<8x8xf32>
    tpu.vector_store %arg4[%c0_7, %c0_8], %10 {strides = array<i32>} : memref<8x8xf32, #tpu.memory_space<vmem>>, vector<8x8xf32>,
    %c0_9 = arith.constant 0 : index
    %c0_10 = arith.constant 0 : index
    %12 = vector.load %arg5[%c0_9, %c0_10] : memref<8x8xf32, #tpu.memory_space<vmem>>, vector<8x8xf32>
    %13 = arith.mulf %5, %5 : vector<32x8xf32>
    %cst_11 = arith.constant dense<0.000000e+00> : vector<8xf32>
    %14 = vector.multi_reduction <add>, %13, %cst_11 [0] : vector<32x8xf32> to vector<8xf32>
    %15 = vector.shape_cast %14 : vector<8xf32> to vector<1x8xf32>
    %16 = vector.broadcast %15 : vector<1x8xf32> to vector<8x8xf32>
    %17 = arith.addf %12, %16 : vector<8x8xf32>
    %c0_12 = arith.constant 0 : index
    %c0_13 = arith.constant 0 : index
    %18 = vector.load %arg5[%c0_12, %c0_13] : memref<8x8xf32, #tpu.memory_space<vmem>>, vector<8x8xf32>
    tpu.vector_store %arg5[%c0_12, %c0_13], %17 {strides = array<i32>} : memref<8x8xf32, #tpu.memory_space<vmem>>, vector<8x8xf32>,
    return
  }
  func.func @transform_0(%arg0: i32, %arg1: i32) -> (i32, i32) {
    %c1_i32 = arith.constant 1 : i32
    %0 = arith.muli %arg0, %c1_i32 : i32
    %1 = arith.addi %0, %arg1 : i32
    %c0_i32 = arith.constant 0 : i32
    %c0_i32_0 = arith.constant 0 : i32
    return %1, %c0_i32 : i32, i32
  }
  func.func @transform_1(%arg0: i32, %arg1: i32) -> (i32, i32) {
    %c0_i32 = arith.constant 0 : i32
    %c0_i32_0 = arith.constant 0 : i32
    %c0_i32_1 = arith.constant 0 : i32
    return %c0_i32, %c0_i32_0 : i32, i32
  }
  func.func @transform_2(%arg0: i32, %arg1: i32) -> (i32, i32) {
    %c0_i32 = arith.constant 0 : i32
    %c0_i32_0 = arith.constant 0 : i32
    return %arg0, %c0_i32 : i32, i32
  }
  func.func @transform_3(%arg0: i32, %arg1: i32) -> (i32, i32) {
    %c0_i32 = arith.constant 0 : i32
    %c0_i32_0 = arith.constant 0 : i32
    return %arg0, %c0_i32 : i32, i32
  }
}

module attributes {stable_mosaic.version = 11 : i64} {
  func.func @_matmul_bias_kernel(%arg0: i32, %arg1: i32, %arg2: memref<16x192xbf16, #tpu.memory_space<vmem>>, %arg3: memref<192x32xbf16, #tpu.memory_space<vmem>>, %arg4: memref<1x32xf32, #tpu.memory_space<vmem>>, %arg5: memref<16x32xf32, #tpu.memory_space<vmem>>) attributes {dimension_semantics = [#tpu.dimension_semantics<parallel>, #tpu.dimension_semantics<parallel>], iteration_bounds = array<i64: 1, 1>, scalar_prefetch = 0 : i64, scratch_operands = 0 : i64, tpu.core_type = #tpu.core_type<tc>, window_params = [{transform_indices = @transform_0, window_bounds = array<i64: 16, 192>}, {transform_indices = @transform_1, window_bounds = array<i64: 192, 32>}, {transform_indices = @transform_2, window_bounds = array<i64: 1, 32>}, {transform_indices = @transform_3, window_bounds = array<i64: 16, 32>}]} {
    %c0 = arith.constant 0 : index
    %c0_0 = arith.constant 0 : index
    %0 = vector.load %arg2[%c0, %c0_0] : memref<16x192xbf16, #tpu.memory_space<vmem>>, vector<16x192xbf16>
    %c0_1 = arith.constant 0 : index
    %c0_2 = arith.constant 0 : index
    %1 = vector.load %arg3[%c0_1, %c0_2] : memref<192x32xbf16, #tpu.memory_space<vmem>>, vector<192x32xbf16>
    %cst = arith.constant dense<0.000000e+00> : vector<16x32xf32>
    %2 = tpu.matmul %0, %1, %cst {dimension_numbers = #tpu.dot_dimension_numbers<[1], [0], [0], [1], [0, 0, 1, 1], [], []>} : vector<16x192xbf16>, vector<192x32xbf16>, vector<16x32xf32> -> vector<16x32xf32>
    %c0_3 = arith.constant 0 : index
    %c0_4 = arith.constant 0 : index
    %3 = vector.load %arg4[%c0_3, %c0_4] : memref<1x32xf32, #tpu.memory_space<vmem>>, vector<1x32xf32>
    %4 = vector.broadcast %3 : vector<1x32xf32> to vector<16x32xf32>
    %5 = arith.addf %2, %4 : vector<16x32xf32>
    %c0_5 = arith.constant 0 : index
    %c0_6 = arith.constant 0 : index
    %6 = vector.load %arg5[%c0_5, %c0_6] : memref<16x32xf32, #tpu.memory_space<vmem>>, vector<16x32xf32>
    tpu.vector_store %arg5[%c0_5, %c0_6], %5 {strides = array<i32>} : memref<16x32xf32, #tpu.memory_space<vmem>>, vector<16x32xf32>,
    return
  }
  func.func @transform_0(%arg0: i32, %arg1: i32) -> (i32, i32) {
    %c0_i32 = arith.constant 0 : i32
    %c0_i32_0 = arith.constant 0 : i32
    return %arg0, %c0_i32 : i32, i32
  }
  func.func @transform_1(%arg0: i32, %arg1: i32) -> (i32, i32) {
    %c0_i32 = arith.constant 0 : i32
    %c0_i32_0 = arith.constant 0 : i32
    return %c0_i32, %arg1 : i32, i32
  }
  func.func @transform_2(%arg0: i32, %arg1: i32) -> (i32, i32) {
    %c0_i32 = arith.constant 0 : i32
    %c0_i32_0 = arith.constant 0 : i32
    return %c0_i32, %arg1 : i32, i32
  }
  func.func @transform_3(%arg0: i32, %arg1: i32) -> (i32, i32) {
    %c0_i32 = arith.constant 0 : i32
    return %arg0, %arg1 : i32, i32
  }
}

</mosaic_0001>

<llo_original>
// kernel: patch_emb_forward.2
$region0: #{patch_emb_forward.2}
  #allocation0 [shape = 'u32[]', space=smem, size = 0x4, offset = 0x4, fixed_abs, tag = 'smem constant byte address 0x4 - core index']
  #allocation1 [shape = 'u32[144,128]{1,0:T(1,128)}', space=vmem, size = 0x12000, scoped, tag = 'internal scratch']
  %s0 = inlined_call_operand.vmem [shape: bf16[32,48], index: 0, kind: input, shape index: {}]
  %s1 = inlined_call_operand.vmem [shape: bf16[48,8], index: 1, kind: input, shape index: {}]
  %s2 = inlined_call_operand.vmem [shape: f32[8,8], index: 2, kind: output, shape index: {0}]
  %s3 = inlined_call_operand.vmem [shape: f32[8,8], index: 3, kind: output, shape index: {1}]
  %4 = xla_tuple %s2, %s3
  %s5 = sld [smem:[#allocation0]]
  $region30: #{patch_emb_forward.2} parent=0
    _
  %s7 = ssub.s32 1, %s5
  %s8 = scalar_select 0, %s7, %s5
  // Predicated region
  $region2: #{patch_emb_forward.2} parent=0 // pred_check
    _
  $region3: #{patch_emb_forward.2} parent=0 // pred_check_branch
    %10 = sbr.rel (0) target = $region5
  $region4: #{patch_emb_forward.2} parent=0 // pred_region
    %s11 = sadd.s32 0, 0
    %s12 = smul.u32 4, %s11
    %p13 = scmp.lt.s32.totalorder %s12, 3
    %s14 = scalar_select %p13, %s12, 3
    %s15 = smul.addr %s14, 4
    %s16 = scalar_lea.vmem %s0, %s15
    %s17 = sadd.s32 0, 0
    %s18 = smul.u32 4, %s17
  $region5: #{patch_emb_forward.2} parent=0 // pred_fallthru
    _
  // Predicated region
  $region6: #{patch_emb_forward.2} parent=0 // pred_check
    _
  $region7: #{patch_emb_forward.2} parent=0 // pred_check_branch
    %20 = sbr.rel (0) target = $region9
  $region8: #{patch_emb_forward.2} parent=0 // pred_region
    _
  $region9: #{patch_emb_forward.2} parent=0 // pred_fallthru
    _
  %s21 = sadd.s32 0, 0
  %s22 = smul.u32 4, %s21
  %p23 = scmp.lt.s32.totalorder %s22, 3
  %s24 = scalar_select %p23, %s22, 3
  %s25 = smul.addr %s24, 4
  %s26 = scalar_lea.vmem %s0, %s25
  %s27 = sadd.s32 0, 0
  %s28 = smul.u32 4, %s27
  %p29 = scmp.lt.s32.totalorder %s28, 3
  %s30 = scalar_select %p29, %s28, 3
  %s31 = smul.addr %s30, 4
  %s32 = scalar_lea.vmem %s0, %s31
  %s33 = sadd.s32 0, 0
  %s34 = smul.u32 4, %s33
  %p36 = scmp.eq.s32.totalorder 0, 0
  // Predicated region
  $region10: #{patch_emb_forward.2} parent=0 // pred_check
    %p37 = pneg %p36
  $region11: #{patch_emb_forward.2} parent=0 // pred_check_branch
    %39 = sbr.rel (%p37) target = $region13
  $region12: #{patch_emb_forward.2} parent=0 // pred_region
    %vm40 = vcmask 64512
    %41 = vst.msk [vmem:[%s2] sm:$0xff] %vm40, 0.0
    %42 = vst.msk [vmem:[%s3] sm:$0xff] %vm40, 0.0
  $region13: #{patch_emb_forward.2} parent=0 // pred_fallthru
    _
  %v43 = vld [vmem:[%s32] sm:$0xf]
  %v44 = vld [vmem:[%s32 + $0x4] sm:$0xf]
  %v45 = vld [vmem:[%s32 + $0x8] sm:$0xf]
  %v46 = vld [vmem:[%s32 + $0xc] sm:$0xf]
  %v47 = vld [vmem:[%s1] sm:$0xf]
  %v48 = vld [vmem:[%s1 + $0x4] sm:$0xf]
  %v49 = vld [vmem:[%s1 + $0x8] sm:$0xf]
  %v50 = vld [vmem:[%s1 + $0xc] sm:$0xf]
  %v51 = vld [vmem:[%s1 + $0x10] sm:$0xf]
  %v52 = vld [vmem:[%s1 + $0x14] sm:$0xf]
  %v57 = vunpack.c.l.b16 %v43
  %v58 = vunpack.c.l.b16 %v44
  %v59 = vunpack.c.l.b16 %v45
  %v60 = vunpack.c.l.b16 %v46
  %v61 = vpack.c.b16 %v58, %v57
  %v62 = vpack.c.b16 %v60, %v59
  %v69 = vunpack.c.l.b16 %v47
  %v70 = vunpack.c.l.b16 %v48
  %v71 = vunpack.c.l.b16 %v49
  %v72 = vunpack.c.l.b16 %v50
  %v73 = vunpack.c.l.b16 %v51
  %v74 = vunpack.c.l.b16 %v52
  %v75 = vpack.c.b16 %v70, %v69
  %v76 = vpack.c.b16 %v72, %v71
  %v77 = vpack.c.b16 %v74, %v73
  %vm81 = vcmask 392192
  %v83 = vsel %vm81, %v61, 0
  %v86 = vsel %vm81, %v62, 0
  %88 = vmatprep.subr.bf16.mxu0 0
  %89 = vmatpush1.bf16.msra.mxu0 %v75
  %90 = vmatprep.subr.bf16.mxu0 0
  %91 = vmatpush1.bf16.msra.mxu0 %v76
  %92 = vmatprep.subr.bf16.mxu0 0
  %93 = vmatpush1.bf16.msra.mxu0 %v77
  %94 = vmatprep.subr.bf16.mxu0 0
  %95 = vmatpush1.bf16.msra.mxu0 0
  %96 = vmatprep.subr.bf16.mxu0 0
  %97 = vmatpush1.bf16.msra.mxu0 0
  %98 = vmatprep.subr.bf16.mxu0 0
  %99 = vmatpush1.bf16.msra.mxu0 0
  %100 = vmatprep.subr.bf16.mxu0 0
  %101 = vmatpush1.bf16.msra.mxu0 0
  %102 = vmatprep.subr.bf16.mxu0 0
  %103 = vmatpush1.bf16.msra.mxu0 0
  %104 = vmatprep.subr.bf16.mxu0 0
  %105 = vmatpush1.bf16.msra.mxu0 0
  %106 = vmatprep.subr.bf16.mxu0 0
  %107 = vmatpush1.bf16.msra.mxu0 0
  %108 = vmatprep.subr.bf16.mxu0 0
  %109 = vmatpush1.bf16.msra.mxu0 0
  %110 = vmatprep.subr.bf16.mxu0 0
  %111 = vmatpush1.bf16.msra.mxu0 0
  %112 = vmatprep.subr.bf16.mxu0 0
  %113 = vmatpush1.bf16.msra.mxu0 0
  %114 = vmatprep.subr.bf16.mxu0 0
  %115 = vmatpush1.bf16.msra.mxu0 0
  %116 = vmatprep.subr.bf16.mxu0 0
  %117 = vmatpush1.bf16.msra.mxu0 0
  %118 = vmatprep.subr.bf16.mxu0 0
  %119 = vmatpush1.bf16.msra.mxu0 0
  %120 = vmatprep.mubr.bf16.mxu0 0
  %121 = vmatmul.mubr.bf16.gmra.mrb[0].mxu0 %v83
  %v122 = vpop.f32.mrb[0].mxu0
  %v123 = vadd.f32 0.0, %v122
  %v124 = vpop.f32.mrb[0].mxu0
  %v125 = vpop.f32.mrb[0].mxu0
  %v126 = vadd.f32 0.0, %v125
  %v127 = vpop.f32.mrb[0].mxu0
  %128 = vmatprep.mubr.bf16.mxu0 0
  %129 = vmatmul.mubr.bf16.gmra.mrb[0].mxu0 %v86
  %v130 = vpop.f32.mrb[0].mxu0
  %v131 = vadd.f32 0.0, %v130
  %v132 = vpop.f32.mrb[0].mxu0
  %v133 = vpop.f32.mrb[0].mxu0
  %v134 = vadd.f32 0.0, %v133
  %v135 = vpop.f32.mrb[0].mxu0
  %136 = vdwg.mxu0
  %v137 = vld [vmem:[%s2] sm:$0xff]
  %vm138 = vcmask 64512
  %v139 = vsel %vm138, %v123, 0.0
  %v140 = vsel %vm138, %v126, 0.0
  %v141 = vadd.f32 %v139, %v140
  %v142 = vsel %vm138, %v131, 0.0
  %v143 = vadd.f32 %v141, %v142
  %v144 = vsel %vm138, %v134, 0.0
  %v145 = vadd.f32 %v143, %v144
  %v146 = vrot.slane %v145, 4
  %v147 = vadd.f32 %v145, %v146
  %v148 = vrot.slane %v147, 2
  %v149 = vadd.f32 %v147, %v148
  %v150 = vrot.slane %v149, 1
  %v151 = vadd.f32 %v149, %v150
  %v152 = vadd.f32 %v137, %v151
  %153 = vst.msk [vmem:[%s2] sm:$0xff] %vm138, %v152
  %v154 = vld [vmem:[%s3] sm:$0xff]
  %v155 = vmul.f32 %v123, %v123
  %v156 = vmul.f32 %v126, %v126
  %v157 = vmul.f32 %v131, %v131
  %v158 = vmul.f32 %v134, %v134
  %v159 = vsel %vm138, %v155, 0.0
  %v160 = vsel %vm138, %v156, 0.0
  %v161 = vadd.f32 %v159, %v160
  %v162 = vsel %vm138, %v157, 0.0
  %v163 = vadd.f32 %v161, %v162
  %v164 = vsel %vm138, %v158, 0.0
  %v165 = vadd.f32 %v163, %v164
  %v166 = vrot.slane %v165, 4
  %v167 = vadd.f32 %v165, %v166
  %v168 = vrot.slane %v167, 2
  %v169 = vadd.f32 %v167, %v168
  %v170 = vrot.slane %v169, 1
  %v171 = vadd.f32 %v169, %v170
  %v172 = vadd.f32 %v154, %v171
  %173 = vst.msk [vmem:[%s3] sm:$0xff] %vm138, %v172
  // Predicated region
  $region14: #{patch_emb_forward.2} parent=0 // pred_check
    _
  $region15: #{patch_emb_forward.2} parent=0 // pred_check_branch
    %175 = sbr.rel (0) target = $region17
  $region16: #{patch_emb_forward.2} parent=0 // pred_region
    _
  $region17: #{patch_emb_forward.2} parent=0 // pred_fallthru
    _
  // Predicated region
  $region18: #{patch_emb_forward.2} parent=0 // pred_check
    _
  $region19: #{patch_emb_forward.2} parent=0 // pred_check_branch
    %177 = sbr.rel (0) target = $region21
  $region20: #{patch_emb_forward.2} parent=0 // pred_region
    _
  $region21: #{patch_emb_forward.2} parent=0 // pred_fallthru
    _
  // Predicated region
  $region22: #{patch_emb_forward.2} parent=0 // pred_check
    _
  $region23: #{patch_emb_forward.2} parent=0 // pred_check_branch
    %179 = sbr.rel (0) target = $region25
  $region24: #{patch_emb_forward.2} parent=0 // pred_region
    _
  $region25: #{patch_emb_forward.2} parent=0 // pred_fallthru
    _
  // Predicated region
  $region26: #{patch_emb_forward.2} parent=0 // pred_check
    _
  $region27: #{patch_emb_forward.2} parent=0 // pred_check_branch
    %181 = sbr.rel (0) target = $region29
  $region28: #{patch_emb_forward.2} parent=0 // pred_region
    _
  $region29: #{patch_emb_forward.2} parent=0 // pred_fallthru
    _

// kernel: patch_emb_forward.3
$region0: #{patch_emb_forward.3}
  #allocation0 [shape = 'u32[]', space=smem, size = 0x4, offset = 0x4, fixed_abs, tag = 'smem constant byte address 0x4 - core index']
  #allocation1 [shape = 'u32[144,128]{1,0:T(1,128)}', space=vmem, size = 0x12000, scoped, tag = 'internal scratch']
  %s0 = inlined_call_operand.vmem [shape: bf16[16,192], index: 0, kind: input, shape index: {}]
  %s1 = inlined_call_operand.vmem [shape: bf16[192,32], index: 1, kind: input, shape index: {}]
  %s2 = inlined_call_operand.vmem [shape: f32[1,32], index: 2, kind: input, shape index: {}]
  %s3 = inlined_call_operand.vmem [shape: f32[16,32], index: 3, kind: output, shape index: {}]
  %s4 = sld [smem:[#allocation0]]
  $region22: #{patch_emb_forward.3} parent=0
    _
  %s6 = ssub.s32 1, %s4
  %s7 = scalar_select 0, %s6, %s4
  // Predicated region
  $region2: #{patch_emb_forward.3} parent=0 // pred_check
    _
  $region3: #{patch_emb_forward.3} parent=0 // pred_check_branch
    %9 = sbr.rel (0) target = $region5
  $region4: #{patch_emb_forward.3} parent=0 // pred_region
    _
  $region5: #{patch_emb_forward.3} parent=0 // pred_fallthru
    _
  // Predicated region
  $region6: #{patch_emb_forward.3} parent=0 // pred_check
    _
  $region7: #{patch_emb_forward.3} parent=0 // pred_check_branch
    %11 = sbr.rel (0) target = $region9
  $region8: #{patch_emb_forward.3} parent=0 // pred_region
    _
  $region9: #{patch_emb_forward.3} parent=0 // pred_fallthru
    _
  // Predicated region
  $region10: #{patch_emb_forward.3} parent=0 // pred_check
    _
  $region11: #{patch_emb_forward.3} parent=0 // pred_check_branch
    %13 = sbr.rel (0) target = $region13
  $region12: #{patch_emb_forward.3} parent=0 // pred_region
    _
  $region13: #{patch_emb_forward.3} parent=0 // pred_fallthru
    _
  %v15 = vld [vmem:[%s0] sm:$0xff]
  %v16 = vld [vmem:[%s0 + $0x8] sm:$0xff]
  %v17 = vld [vmem:[%s1] sm:$0xf]
  %v18 = vld [vmem:[%s1 + $0x4] sm:$0xf]
  %v19 = vld [vmem:[%s1 + $0x8] sm:$0xf]
  %v20 = vld [vmem:[%s1 + $0xc] sm:$0xf]
  %v21 = vld [vmem:[%s1 + $0x10] sm:$0xf]
  %v22 = vld [vmem:[%s1 + $0x14] sm:$0xf]
  %v23 = vld [vmem:[%s1 + $0x18] sm:$0xf]
  %v24 = vld [vmem:[%s1 + $0x1c] sm:$0xf]
  %v25 = vld [vmem:[%s1 + $0x20] sm:$0xf]
  %v26 = vld [vmem:[%s1 + $0x24] sm:$0xf]
  %v27 = vld [vmem:[%s1 + $0x28] sm:$0xf]
  %v28 = vld [vmem:[%s1 + $0x2c] sm:$0xf]
  %v29 = vld [vmem:[%s1 + $0x30] sm:$0xf]
  %v30 = vld [vmem:[%s1 + $0x34] sm:$0xf]
  %v31 = vld [vmem:[%s1 + $0x38] sm:$0xf]
  %v32 = vld [vmem:[%s1 + $0x3c] sm:$0xf]
  %v33 = vld [vmem:[%s1 + $0x40] sm:$0xf]
  %v34 = vld [vmem:[%s1 + $0x44] sm:$0xf]
  %v35 = vld [vmem:[%s1 + $0x48] sm:$0xf]
  %v36 = vld [vmem:[%s1 + $0x4c] sm:$0xf]
  %v37 = vld [vmem:[%s1 + $0x50] sm:$0xf]
  %v38 = vld [vmem:[%s1 + $0x54] sm:$0xf]
  %v39 = vld [vmem:[%s1 + $0x58] sm:$0xf]
  %v40 = vld [vmem:[%s1 + $0x5c] sm:$0xf]
  %v41 = vld [vmem:[%s2] sm:$0x1]
  %v43 = vlaneseq
  %v44 = vshrl.u32 %v43, 7
  %v45 = vsub.s32 0, %v44
  %v46 = vrot.slane %v41, %v45
  %v50 = vunpack.c.l.b16 %v15
  %v51 = vunpack.c.h.b16 %v15
  %v52 = vunpack.c.l.b16 %v16
  %v53 = vunpack.c.h.b16 %v16
  %v54 = vpack.c.b16 %v52, %v50
  %v55 = vpack.c.b16 %v53, %v51
  %v81 = vunpack.c.l.b16 %v17
  %v82 = vunpack.c.l.b16 %v18
  %v83 = vunpack.c.l.b16 %v19
  %v84 = vunpack.c.l.b16 %v20
  %v85 = vunpack.c.l.b16 %v21
  %v86 = vunpack.c.l.b16 %v22
  %v87 = vunpack.c.l.b16 %v23
  %v88 = vunpack.c.l.b16 %v24
  %v89 = vunpack.c.l.b16 %v25
  %v90 = vunpack.c.l.b16 %v26
  %v91 = vunpack.c.l.b16 %v27
  %v92 = vunpack.c.l.b16 %v28
  %v93 = vunpack.c.l.b16 %v29
  %v94 = vunpack.c.l.b16 %v30
  %v95 = vunpack.c.l.b16 %v31
  %v96 = vunpack.c.l.b16 %v32
  %v97 = vunpack.c.l.b16 %v33
  %v98 = vunpack.c.l.b16 %v34
  %v99 = vunpack.c.l.b16 %v35
  %v100 = vunpack.c.l.b16 %v36
  %v101 = vunpack.c.l.b16 %v37
  %v102 = vunpack.c.l.b16 %v38
  %v103 = vunpack.c.l.b16 %v39
  %v104 = vunpack.c.l.b16 %v40
  %v105 = vpack.c.b16 %v82, %v81
  %v106 = vpack.c.b16 %v84, %v83
  %v107 = vpack.c.b16 %v86, %v85
  %v108 = vpack.c.b16 %v88, %v87
  %v109 = vpack.c.b16 %v90, %v89
  %v110 = vpack.c.b16 %v92, %v91
  %v111 = vpack.c.b16 %v94, %v93
  %v112 = vpack.c.b16 %v96, %v95
  %v113 = vpack.c.b16 %v98, %v97
  %v114 = vpack.c.b16 %v100, %v99
  %v115 = vpack.c.b16 %v102, %v101
  %v116 = vpack.c.b16 %v104, %v103
  %vm129 = vcmask 523264
  %v131 = vsel %vm129, %v55, 0
  %133 = vmatprep.subr.bf16.mxu0 0
  %134 = vmatpush1.bf16.msra.mxu0 %v105
  %135 = vmatprep.subr.bf16.mxu0 0
  %136 = vmatpush1.bf16.msra.mxu0 %v106
  %137 = vmatprep.subr.bf16.mxu0 0
  %138 = vmatpush1.bf16.msra.mxu0 %v107
  %139 = vmatprep.subr.bf16.mxu0 0
  %140 = vmatpush1.bf16.msra.mxu0 %v108
  %141 = vmatprep.subr.bf16.mxu0 0
  %142 = vmatpush1.bf16.msra.mxu0 %v109
  %143 = vmatprep.subr.bf16.mxu0 0
  %144 = vmatpush1.bf16.msra.mxu0 %v110
  %145 = vmatprep.subr.bf16.mxu0 0
  %146 = vmatpush1.bf16.msra.mxu0 %v111
  %147 = vmatprep.subr.bf16.mxu0 0
  %148 = vmatpush1.bf16.msra.mxu0 %v112
  %149 = vmatprep.subr.bf16.mxu0 0
  %150 = vmatpush1.bf16.msra.mxu0 %v113
  %151 = vmatprep.subr.bf16.mxu0 0
  %152 = vmatpush1.bf16.msra.mxu0 %v114
  %153 = vmatprep.subr.bf16.mxu0 0
  %154 = vmatpush1.bf16.msra.mxu0 %v115
  %155 = vmatprep.subr.bf16.mxu0 0
  %156 = vmatpush1.bf16.msra.mxu0 %v116
  %157 = vmatprep.subr.bf16.mxu0 0
  %158 = vmatpush1.bf16.msra.mxu0 0
  %159 = vmatprep.subr.bf16.mxu0 0
  %160 = vmatpush1.bf16.msra.mxu0 0
  %161 = vmatprep.subr.bf16.mxu0 0
  %162 = vmatpush1.bf16.msra.mxu0 0
  %163 = vmatprep.subr.bf16.mxu0 0
  %164 = vmatpush1.bf16.msra.mxu0 0
  %165 = vmatprep.mubr.bf16.mxu0 %v131
  %166 = vmatmul.mubr.bf16.gmra.mrb[0].mxu0 %v54
  %v167 = vpop.f32.mrb[0].mxu0
  %v168 = vadd.f32 %v46, %v167
  %v169 = vpop.f32.mrb[0].mxu0
  %v170 = vpop.f32.mrb[0].mxu0
  %v171 = vadd.f32 %v46, %v170
  %v172 = vpop.f32.mrb[0].mxu0
  %173 = vdwg.mxu0
  %vm174 = vcmask 261120
  %175 = vst.msk [vmem:[%s3] sm:$0xff] %vm174, %v168
  %176 = vst.msk [vmem:[%s3 + $0x8] sm:$0xff] %vm174, %v171
  // Predicated region
  $region14: #{patch_emb_forward.3} parent=0 // pred_check
    _
  $region15: #{patch_emb_forward.3} parent=0 // pred_check_branch
    %178 = sbr.rel (0) target = $region17
  $region16: #{patch_emb_forward.3} parent=0 // pred_region
    _
  $region17: #{patch_emb_forward.3} parent=0 // pred_fallthru
    _
  // Predicated region
  $region18: #{patch_emb_forward.3} parent=0 // pred_check
    _
  $region19: #{patch_emb_forward.3} parent=0 // pred_check_branch
    %180 = sbr.rel (0) target = $region21
  $region20: #{patch_emb_forward.3} parent=0 // pred_region
    _
  $region21: #{patch_emb_forward.3} parent=0 // pred_fallthru
    _

</llo_original>
